<compile_context>
chip_gen: v6e
topology: v6e:2x2x1
jax: 0.10.0
libtpu: 0.0.40
codegen_flags: <defaults>
</compile_context>

<pallas_src>
import functools

import jax
import jax.numpy as jnp
from jax.experimental import pallas as pl
from jax.experimental.pallas import tpu as pltpu


def _row_sum_kernel(x_ref, o_ref, *, hw, chunk, chunks_per_seg, needs_mask):
    """Accumulate per-row sums of a (rows, H*W) array, one (rows, chunk) tile
    per grid step.  o_ref is a (rows, 128) f32 block resident across the chunk
    (reduction) axis; every lane holds the same running sum for its row."""
    s_i = pl.program_id(0)   # segment (parallel)
    c_i = pl.program_id(1)   # chunk within segment (arbitrary / reduction)

    @pl.when(c_i == 0)
    def _init():
        o_ref[...] = jnp.zeros_like(o_ref)

    def _plain():
        # Upcast fused into the sum: no separate full-width f32 temporary.
        part = jnp.sum(x_ref[...], axis=1, keepdims=True, dtype=jnp.float32)
        o_ref[...] += part                     # (rows, 1) broadcast over lanes

    if not needs_mask:
        # H*W tiles evenly and the segment split is exact: no mask anywhere.
        _plain()
    else:
        g = s_i * chunks_per_seg + c_i         # global chunk index
        overhangs = (g + 1) * chunk > hw       # ragged tail or fully-OOB chunk

        @pl.when(jnp.logical_not(overhangs))
        def _fast():
            _plain()

        @pl.when(overhangs)
        def _masked():
            x = x_ref[...].astype(jnp.float32)
            lane = jax.lax.broadcasted_iota(jnp.int32, x.shape, dimension=1)
            valid = (g * chunk + lane) < hw
            part = jnp.sum(jnp.where(valid, x, 0.0), axis=1, keepdims=True)
            o_ref[...] += part


def _pick_chunk(hw, rows, itemsize, target_bytes=2 << 20):
    # ~2 MiB per (rows, CHUNK) block (no sublane padding in the row-packed
    # layout, so this is the real VMEM footprint); CHUNK multiple of 128 for
    # lane-dense DMA.  Double-buffered -> ~4 MiB, fits every chip's default
    # scoped VMEM (v5e 16 MiB, v6e/v7x 32 MiB) with headroom.
    chunk = ((target_bytes // (rows * itemsize)) // 128) * 128
    chunk = max(chunk, 128)
    if chunk >= hw:
        return int(hw)        # single full-extent chunk (legal for any H*W)
    return int(chunk)


def grayworld_loss(x, *, chunk=None, n_segments=2):
    """x: (B, 3, H, W). Returns (B, 1, 1, 1), matching the PyTorch module."""
    b, c, h, w = x.shape
    assert c == 3, "GrayWorldloss expects 3 channels (RGB)"
    hw = h * w
    rows = b * c

    xf = x.reshape(rows, hw)  # free view for contiguous NCHW -> lane-dense DMA

    if chunk is None:
        chunk = _pick_chunk(hw, rows, xf.dtype.itemsize)
    if chunk >= hw:
        chunk = hw
    else:
        chunk = max(128, (int(chunk) // 128) * 128)
        if chunk >= hw:
            chunk = hw

    n_chunks = pl.cdiv(hw, chunk)
    n_segments = int(max(1, min(n_segments, n_chunks)))
    chunks_per_seg = pl.cdiv(n_chunks, n_segments)
    padded_chunks = n_segments * chunks_per_seg
    needs_mask = (hw % chunk != 0) or (padded_chunks != n_chunks)

    if padded_chunks != n_chunks:
        # Some (segment, chunk) steps land past the last real chunk: clamp the
        # DMA to the last block; the in-kernel mask zeroes its contribution.
        def in_idx(s, k):
            return (0, jnp.minimum(s * chunks_per_seg + k, n_chunks - 1))
    else:
        def in_idx(s, k):
            return (0, s * chunks_per_seg + k)

    kernel = functools.partial(
        _row_sum_kernel,
        hw=hw, chunk=chunk, chunks_per_seg=chunks_per_seg, needs_mask=needs_mask,
    )

    # NOTE: pipeline_mode=pl.Buffered(3) on the input spec is a further option
    # on v7x (3.2 TB/s HBM) once blocks are sized generation-aware; omitted to
    # keep the default 2-deep pipeline portable.
    seg_sums = pl.pallas_call(
        kernel,
        out_shape=jax.ShapeDtypeStruct((rows, n_segments * 128), jnp.float32),
        grid_spec=pltpu.PrefetchScalarGridSpec(
            num_scalar_prefetch=0,
            grid=(n_segments, chunks_per_seg),
            in_specs=[
                # (rows, chunk): sublane dim = full row extent (no padding),
                # lane dim multiple of 128 (or the full H*W extent).
                pl.BlockSpec((rows, chunk), in_idx),
            ],
            # Same output block across the chunk (reduction) axis: it stays
            # resident in VMEM as the accumulator, written back once per
            # (segment).  Lane dim 128 -> unmasked lane-dense stores.
            out_specs=pl.BlockSpec((rows, 128), lambda s, k: (0, s)),
        ),
        compiler_params=pltpu.CompilerParams(
            dimension_semantics=("parallel", "arbitrary"),
        ),
        cost_estimate=pl.CostEstimate(
            flops=int(rows * hw),
            transcendentals=0,
            bytes_accessed=int(xf.size * xf.dtype.itemsize
                               + rows * n_segments * 128 * 4),
        ),
    )(xf)

    # All 128 lanes of a segment hold the same running sum; take lane 0 of
    # each segment and combine segments + the O(B) finalize in plain JAX.
    row_sums = jnp.sum(seg_sums[:, ::128], axis=1)          # (B*3,)
    m = (row_sums / jnp.float32(hw)).reshape(b, 3)           # per-channel means
    avg = jnp.mean(m, axis=1, keepdims=True)
    d = (m - avg) ** 2                                        # Dr, Dg, Db
    k = jnp.sqrt(jnp.sum(d * d, axis=1, keepdims=True))      # sqrt(Dr^2+Dg^2+Db^2)
    return k.reshape(b, 1, 1, 1).astype(x.dtype)


def _reference(x):
    # Pure-JAX reference mirroring the PyTorch forward exactly.
    mean_rgb = jnp.mean(x.astype(jnp.float32), axis=(2, 3), keepdims=True)
    mr = mean_rgb[:, 0:1]
    mg = mean_rgb[:, 1:2]
    mb = mean_rgb[:, 2:3]
    avg = (mr + mg + mb) / 3.0
    Dr = (mr - avg) ** 2
    Dg = (mg - avg) ** 2
    Db = (mb - avg) ** 2
    return jnp.sqrt(Dr ** 2 + Dg ** 2 + Db ** 2)


if __name__ == "__main__":
    key = jax.random.PRNGKey(0)

    # Case 1: small f32 input, single-chunk / single-segment path.
    x = jax.random.uniform(key, (2, 3, 16, 16), dtype=jnp.float32)
    k = jax.block_until_ready(grayworld_loss(x))
    k_ref = _reference(x)
    assert k.shape == (2, 1, 1, 1)
    assert jnp.allclose(k, k_ref, atol=1e-6, rtol=1e-4), (k, k_ref)

    # Case 2: force small chunks + 2 segments so the multi-chunk accumulation,
    # the tail-only mask, and the fully-OOB padded chunk are all exercised
    # (H*W = 576, CHUNK = 128 -> 5 real chunks, 2 segments of 3).
    x2 = jax.random.uniform(jax.random.PRNGKey(1), (2, 3, 24, 24), dtype=jnp.float32)
    k2 = jax.block_until_ready(grayworld_loss(x2, chunk=128, n_segments=2))
    k2_ref = _reference(x2)
    assert jnp.allclose(k2, k2_ref, atol=1e-6, rtol=1e-4), (k2, k2_ref)

    # Case 3: bf16 input (dtype-preserving DMA, upcast fused into the sum).
    x3 = jax.random.uniform(jax.random.PRNGKey(2), (2, 3, 32, 32),
                            dtype=jnp.float32).astype(jnp.bfloat16)
    k3 = jax.block_until_ready(grayworld_loss(x3, chunk=256, n_segments=2))
    k3_ref = _reference(x3)
    assert jnp.allclose(k3.astype(jnp.float32), k3_ref, atol=1e-4, rtol=2e-2), (k3, k3_ref)

    print("KERNEL_OK")
</pallas_src>

<mosaic_0001>
module attributes {stable_mosaic.version = 11 : i64} {
  func.func @_row_sum_kernel(%arg0: i32, %arg1: i32, %arg2: memref<6x256xf32, #tpu.memory_space<vmem>>, %arg3: memref<6x128xf32, #tpu.memory_space<vmem>>) attributes {dimension_semantics = [#tpu.dimension_semantics<parallel>, #tpu.dimension_semantics<arbitrary>], iteration_bounds = array<i64: 1, 1>, scalar_prefetch = 0 : i64, scratch_operands = 0 : i64, tpu.core_type = #tpu.core_type<tc>, window_params = [{transform_indices = @transform_0, window_bounds = array<i64: 6, 256>}, {transform_indices = @transform_1, window_bounds = array<i64: 6, 128>}]} {
    %c0_i32 = arith.constant 0 : i32
    %0 = arith.cmpi eq, %arg1, %c0_i32 : i32
    %1 = arith.extui %0 : i1 to i32
    %c0_i32_0 = arith.constant 0 : i32
    %2 = arith.cmpi ne, %1, %c0_i32_0 : i32
    scf.if %2 {
      %cst_6 = arith.constant 0.000000e+00 : f32
      %10 = vector.broadcast %cst_6 : f32 to vector<6x128xf32>
      %c0_7 = arith.constant 0 : index
      %c0_8 = arith.constant 0 : index
      %11 = vector.load %arg3[%c0_7, %c0_8] : memref<6x128xf32, #tpu.memory_space<vmem>>, vector<6x128xf32>
      tpu.vector_store %arg3[%c0_7, %c0_8], %10 {strides = array<i32>} : memref<6x128xf32, #tpu.memory_space<vmem>>, vector<6x128xf32>,
    } else {
    }
    %c0 = arith.constant 0 : index
    %c0_1 = arith.constant 0 : index
    %3 = vector.load %arg2[%c0, %c0_1] : memref<6x256xf32, #tpu.memory_space<vmem>>, vector<6x256xf32>
    %cst = arith.constant dense<0.000000e+00> : vector<6xf32>
    %4 = vector.multi_reduction <add>, %3, %cst [1] : vector<6x256xf32> to vector<6xf32>
    %5 = vector.shape_cast %4 : vector<6xf32> to vector<6x1xf32>
    %c0_2 = arith.constant 0 : index
    %c0_3 = arith.constant 0 : index
    %6 = vector.load %arg3[%c0_2, %c0_3] : memref<6x128xf32, #tpu.memory_space<vmem>>, vector<6x128xf32>
    %7 = vector.broadcast %5 : vector<6x1xf32> to vector<6x128xf32>
    %8 = arith.addf %6, %7 : vector<6x128xf32>
    %c0_4 = arith.constant 0 : index
    %c0_5 = arith.constant 0 : index
    %9 = vector.load %arg3[%c0_4, %c0_5] : memref<6x128xf32, #tpu.memory_space<vmem>>, vector<6x128xf32>
    tpu.vector_store %arg3[%c0_4, %c0_5], %8 {strides = array<i32>} : memref<6x128xf32, #tpu.memory_space<vmem>>, vector<6x128xf32>,
    return
  }
  func.func @transform_0(%arg0: i32, %arg1: i32) -> (i32, i32) {
    %c1_i32 = arith.constant 1 : i32
    %0 = arith.muli %arg0, %c1_i32 : i32
    %1 = arith.addi %0, %arg1 : i32
    %c0_i32 = arith.constant 0 : i32
    %c0_i32_0 = arith.constant 0 : i32
    return %c0_i32, %1 : i32, i32
  }
  func.func @transform_1(%arg0: i32, %arg1: i32) -> (i32, i32) {
    %c0_i32 = arith.constant 0 : i32
    %c0_i32_0 = arith.constant 0 : i32
    return %c0_i32, %arg0 : i32, i32
  }
}

</mosaic_0001>

<llo_original>
// kernel: tpu_custom_call.1
$region0: #{tpu_custom_call.1}
  #allocation0 [shape = 'u32[]', space=smem, size = 0x4, offset = 0x4, fixed_abs, tag = 'smem constant byte address 0x4 - core index']
  #allocation1 [shape = 'u32[144,128]{1,0:T(1,128)}', space=vmem, size = 0x12000, scoped, tag = 'internal scratch']
  %s0 = inlined_call_operand.hbm [shape: f32[6,256], index: 0, kind: input, shape index: {}]
  %s1 = inlined_call_operand.hbm [shape: f32[6,128], index: 1, kind: output, shape index: {}]
  %s2 = sld [smem:[#allocation0]]
  $region22: #{tpu_custom_call.1} parent=0
    _
  %s4 = ssub.s32 1, %s2
  %s5 = scalar_select 0, %s4, %s2
  $region1: #{tpu_custom_call.1} parent=0
    #allocation2 [shape = 'u8[8192]{0}', space=vmem, size = 0x2000, scoped, tag = 'input window, operand 0, single buffered']
    #allocation3 [shape = 's32[1]{0}', space=sflag, size = 0x4, scoped, tag = 'scoped memory for tpu_custom_call.1']
    #allocation4 [shape = 's32[1]{0}', space=sflag, size = 0x4, scoped, tag = 'scoped memory for tpu_custom_call.1']
    #allocation5 [shape = 'u8[4096]{0}', space=vmem, size = 0x1000, scoped, tag = 'output window, operand 0, single buffered']
    %6 = vsyncpa [#allocation3], 0
    %7 = vsyncpa [#allocation4], 0
    // Predicated region
    $region2: #{tpu_custom_call.1} parent=1 // pred_check
      _
    $region3: #{tpu_custom_call.1} parent=1 // pred_check_branch
      %9 = sbr.rel (0) target = $region5
    $region4: #{tpu_custom_call.1} parent=1 // pred_region
      %s10 = sadd.s32 0, 0
      %s11 = smul.u32 2, %s10
      %s13 = ssub.s32 256, 256
      %14 = vsyncadd [#allocation3], %s13
      %s15 = smul.addr %s11, 128
      %s16 = scalar_lea.hbm %s0, %s15
      %s18 = sshll.u32 [#allocation2], 4
      %s19 = int_to_ptr.vmem [resolvable:$true] %s18
      %21 = dma.hbm_to_vmem [thread:$0]  %s16, 256, %s19, [#allocation3]
    $region5: #{tpu_custom_call.1} parent=1 // pred_fallthru
      _
    // Predicated region
    $region6: #{tpu_custom_call.1} parent=1 // pred_check
      _
    $region7: #{tpu_custom_call.1} parent=1 // pred_check_branch
      %23 = sbr.rel (0) target = $region9
    $region8: #{tpu_custom_call.1} parent=1 // pred_region
      %24 = dma.done [#allocation3], 256
    $region9: #{tpu_custom_call.1} parent=1 // pred_fallthru
      _
    %s25 = sadd.s32 0, 0
    %s26 = smul.u32 2, %s25
    %p27 = scmp.eq.s32.totalorder 0, 0
    // Predicated region
    $region10: #{tpu_custom_call.1} parent=1 // pred_check
      %p28 = pneg %p27
    $region11: #{tpu_custom_call.1} parent=1 // pred_check_branch
      %30 = sbr.rel (%p28) target = $region13
    $region12: #{tpu_custom_call.1} parent=1 // pred_region
      %31 = vst [vmem:[#allocation5] sm:$0x3f] 0.0
    $region13: #{tpu_custom_call.1} parent=1 // pred_fallthru
      _
    %v32 = vld [vmem:[#allocation2] sm:$0x3f]
    %v33 = vld [vmem:[#allocation2 + $0x8] sm:$0x3f]
    %vm34 = vcmask 1045504
    %v35 = vsel %vm34, %v32, 0.0
    %v36 = vsel %vm34, %v33, 0.0
    %v37 = vadd.f32 %v35, %v36
    %38 = vadd.xlane.f32.xlu0 %v37
    %v39 = vpop.xlane.xlu0 %38
    %v40 = vld [vmem:[#allocation5] sm:$0x3f]
    %v41 = vadd.f32 %v40, %v39
    %42 = vst [vmem:[#allocation5] sm:$0x3f] %v41
    // Predicated region
    $region14: #{tpu_custom_call.1} parent=1 // pred_check
      _
    $region15: #{tpu_custom_call.1} parent=1 // pred_check_branch
      %44 = sbr.rel (0) target = $region17
    $region16: #{tpu_custom_call.1} parent=1 // pred_region
      %s46 = ssub.s32 128, 128
      %47 = vsyncadd [#allocation4], %s46
      %s49 = sshll.u32 [#allocation5], 4
      %s50 = int_to_ptr.vmem [resolvable:$true] %s49
      %52 = dma.vmem_to_hbm [thread:$0]  %s50, 128, %s1, [#allocation4]
    $region17: #{tpu_custom_call.1} parent=1 // pred_fallthru
      _
    // Predicated region
    $region18: #{tpu_custom_call.1} parent=1 // pred_check
      _
    $region19: #{tpu_custom_call.1} parent=1 // pred_check_branch
      %54 = sbr.rel (0) target = $region21
    $region20: #{tpu_custom_call.1} parent=1 // pred_region
      %55 = dma.done [#allocation4], 128
    $region21: #{tpu_custom_call.1} parent=1 // pred_fallthru
      _
    %56 = vsyncpa [#allocation3], 1
    %57 = vsyncpa [#allocation4], 1

</llo_original>
